<compile_context>
chip_gen: v7x
topology: tpu7x:2x2x1
jax: 0.10.0
libtpu: 0.0.40
codegen_flags: <defaults>
</compile_context>

<pallas_src>
import functools

import jax
import jax.numpy as jnp
from jax.experimental import pallas as pl
from jax.experimental.pallas import tpu as pltpu


def _round_up(x, m):
    return ((x + m - 1) // m) * m


def actor_kernel(ab_ref, s_ref, g_ref, w1a_ref, w1b_ref, b1_ref,
                 w2_ref, b2_ref, w3_ref, b3_ref, o_ref):
    action_bound = ab_ref[0, 0]

    # Layer 1 (concat folded into two MXU pushes): bf16 operands, f32 accum.
    s = s_ref[...].astype(jnp.bfloat16)
    g = g_ref[...].astype(jnp.bfloat16)
    h1 = (jnp.dot(s, w1a_ref[...], preferred_element_type=jnp.float32)
          + jnp.dot(g, w1b_ref[...], preferred_element_type=jnp.float32)
          + b1_ref[...])
    h1 = jnp.maximum(h1, 0.0)

    # Layer 2: (BT, fc_p) @ (fc_p, fc_p)
    h2 = jnp.dot(h1.astype(jnp.bfloat16), w2_ref[...],
                 preferred_element_type=jnp.float32) + b2_ref[...]
    h2 = jnp.maximum(h2, 0.0)

    # Layer 3 + tanh + action-bound scale: (BT, fc_p) @ (fc_p, action_dim)
    h3 = jnp.dot(h2.astype(jnp.bfloat16), w3_ref[...],
                 preferred_element_type=jnp.float32) + b3_ref[...]
    o_ref[...] = (jnp.tanh(h3) * action_bound).astype(o_ref.dtype)


def prepare_params(params, state_dim):
    """One-time (outside the hot path): lane-pad fc dim, split W1, cast to bf16.

    Padded columns/rows are exactly zero, so they propagate as exact zeros
    through relu and never touch the un-padded output columns.
    """
    w1, b1, w2, b2, w3, b3 = params
    fc = w1.shape[1]
    fc_p = _round_up(fc, 128)
    pad_c = fc_p - fc
    w1a = jnp.pad(w1[:state_dim], ((0, 0), (0, pad_c))).astype(jnp.bfloat16)
    w1b = jnp.pad(w1[state_dim:], ((0, 0), (0, pad_c))).astype(jnp.bfloat16)
    b1p = jnp.pad(b1, ((0, 0), (0, pad_c))).astype(jnp.float32)
    w2p = jnp.pad(w2, ((0, pad_c), (0, pad_c))).astype(jnp.bfloat16)
    b2p = jnp.pad(b2, ((0, 0), (0, pad_c))).astype(jnp.float32)
    w3p = jnp.pad(w3, ((0, pad_c), (0, 0))).astype(jnp.bfloat16)
    b3p = b3.astype(jnp.float32)
    return (w1a, w1b, b1p, w2p, b2p, w3p, b3p)


@functools.partial(jax.jit, static_argnames=("batch_tile",))
def actor_forward(state, goal, prepared, action_bound, *, batch_tile=1024):
    """state, goal: (B, state_dim) float32.  Returns (B, action_dim) float32."""
    w1a, w1b, b1, w2, b2, w3, b3 = prepared
    B, state_dim = state.shape
    fc_p = w1a.shape[1]
    action_dim = w3.shape[1]

    # Batch tile: multiple of 8 sublanes, at most batch_tile, and capped at
    # ceil(B/2) so B > one tile always yields >= 2 grid steps (v7x megacore).
    half = _round_up(max(-(-B // 2), 1), 8)
    bt = max(8, (min(batch_tile, half) // 8) * 8)
    grid = (pl.cdiv(B, bt),)

    ab = jnp.asarray(action_bound, jnp.float32).reshape(1, 1)

    # Weights/biases: constant index_map -> resident in VMEM across all steps.
    resident = lambda shape: pl.BlockSpec(shape, lambda i: (0, 0))

    return pl.pallas_call(
        actor_kernel,
        out_shape=jax.ShapeDtypeStruct((B, action_dim), jnp.float32),
        grid=grid,
        in_specs=[
            pl.BlockSpec((1, 1), lambda i: (0, 0),
                         memory_space=pltpu.MemorySpace.SMEM),   # action_bound
            pl.BlockSpec((bt, state_dim), lambda i: (i, 0)),     # state
            pl.BlockSpec((bt, state_dim), lambda i: (i, 0)),     # goal
            resident((state_dim, fc_p)),                         # W1[:state_dim]
            resident((state_dim, fc_p)),                         # W1[state_dim:]
            resident((1, fc_p)),                                 # b1
            resident((fc_p, fc_p)),                              # W2
            resident((1, fc_p)),                                 # b2
            resident((fc_p, action_dim)),                        # W3
            resident((1, action_dim)),                           # b3
        ],
        out_specs=pl.BlockSpec((bt, action_dim), lambda i: (i, 0)),
        compiler_params=pltpu.CompilerParams(
            dimension_semantics=("parallel",),
            vmem_limit_bytes=32 * 1024 * 1024,
        ),
    )(ab, state, goal, w1a, w1b, b1, w2, b2, w3, b3)


def init_params(key, state_dim, action_dim, fc_units):
    """Deterministic synthetic init; weights stored as (in, out)."""
    ks = jax.random.split(key, 6)
    in1 = 2 * state_dim
    scale1 = 1.0 / jnp.sqrt(in1)
    scale2 = 1.0 / jnp.sqrt(fc_units)
    w1 = jax.random.uniform(ks[0], (in1, fc_units), jnp.float32, -scale1, scale1)
    b1 = jax.random.uniform(ks[1], (1, fc_units), jnp.float32, -scale1, scale1)
    w2 = jax.random.uniform(ks[2], (fc_units, fc_units), jnp.float32, -scale2, scale2)
    b2 = jax.random.uniform(ks[3], (1, fc_units), jnp.float32, -scale2, scale2)
    w3 = jax.random.uniform(ks[4], (fc_units, action_dim), jnp.float32, -scale2, scale2)
    b3 = jax.random.uniform(ks[5], (1, action_dim), jnp.float32, -scale2, scale2)
    return (w1, b1, w2, b2, w3, b3)


def actor_reference(state, goal, params, action_bound):
    w1, b1, w2, b2, w3, b3 = params
    x = jnp.concatenate([state, goal], axis=1)
    h1 = jax.nn.relu(x @ w1 + b1)
    h2 = jax.nn.relu(h1 @ w2 + b2)
    return jnp.tanh(h2 @ w3 + b3) * action_bound


if __name__ == "__main__":
    batch = 8
    state_dim = 8
    action_dim = 4
    fc_units = 64          # module default
    action_bound = 2.0

    key = jax.random.PRNGKey(0)
    k_s, k_g, k_p = jax.random.split(key, 3)
    state = jax.random.normal(k_s, (batch, state_dim), jnp.float32)
    goal = jax.random.normal(k_g, (batch, state_dim), jnp.float32)
    params = init_params(k_p, state_dim, action_dim, fc_units)
    prepared = prepare_params(params, state_dim)

    out = actor_forward(state, goal, prepared, action_bound)
    out = jax.block_until_ready(out)

    ref = actor_reference(state, goal, params, action_bound)
    assert out.shape == (batch, action_dim), out.shape
    # bf16 MXU operands -> looser tolerance than pure-f32.
    assert jnp.allclose(out, ref, atol=5e-2, rtol=5e-2), \
        float(jnp.max(jnp.abs(out - ref)))

    print("KERNEL_OK")
</pallas_src>

<mosaic_0001>
module attributes {stable_mosaic.version = 11 : i64} {
  func.func @actor_kernel(%arg0: i32, %arg1: memref<1x1xf32, #tpu.memory_space<smem>>, %arg2: memref<8x8xf32, #tpu.memory_space<vmem>>, %arg3: memref<8x8xf32, #tpu.memory_space<vmem>>, %arg4: memref<8x128xbf16, #tpu.memory_space<vmem>>, %arg5: memref<8x128xbf16, #tpu.memory_space<vmem>>, %arg6: memref<1x128xf32, #tpu.memory_space<vmem>>, %arg7: memref<128x128xbf16, #tpu.memory_space<vmem>>, %arg8: memref<1x128xf32, #tpu.memory_space<vmem>>, %arg9: memref<128x4xbf16, #tpu.memory_space<vmem>>, %arg10: memref<1x4xf32, #tpu.memory_space<vmem>>, %arg11: memref<8x4xf32, #tpu.memory_space<vmem>>) attributes {dimension_semantics = [#tpu.dimension_semantics<parallel>], iteration_bounds = array<i64: 1>, scalar_prefetch = 0 : i64, scratch_operands = 0 : i64, tpu.core_type = #tpu.core_type<tc>, window_params = [{transform_indices = @transform_0, window_bounds = array<i64: 1, 1>}, {transform_indices = @transform_1, window_bounds = array<i64: 8, 8>}, {transform_indices = @transform_2, window_bounds = array<i64: 8, 8>}, {pipeline_mode = #tpu.pipeline_mode<synchronous>, transform_indices = @transform_3, window_bounds = array<i64: 8, 128>}, {pipeline_mode = #tpu.pipeline_mode<synchronous>, transform_indices = @transform_4, window_bounds = array<i64: 8, 128>}, {pipeline_mode = #tpu.pipeline_mode<synchronous>, transform_indices = @transform_5, window_bounds = array<i64: 1, 128>}, {pipeline_mode = #tpu.pipeline_mode<synchronous>, transform_indices = @transform_6, window_bounds = array<i64: 128, 128>}, {pipeline_mode = #tpu.pipeline_mode<synchronous>, transform_indices = @transform_7, window_bounds = array<i64: 1, 128>}, {pipeline_mode = #tpu.pipeline_mode<synchronous>, transform_indices = @transform_8, window_bounds = array<i64: 128, 4>}, {pipeline_mode = #tpu.pipeline_mode<synchronous>, transform_indices = @transform_9, window_bounds = array<i64: 1, 4>}, {transform_indices = @transform_10, window_bounds = array<i64: 8, 4>}]} {
    %c0 = arith.constant 0 : index
    %c0_0 = arith.constant 0 : index
    %0 = memref.load %arg1[%c0, %c0_0] : memref<1x1xf32, #tpu.memory_space<smem>>
    %c0_1 = arith.constant 0 : index
    %c0_2 = arith.constant 0 : index
    %1 = vector.load %arg2[%c0_1, %c0_2] : memref<8x8xf32, #tpu.memory_space<vmem>>, vector<8x8xf32>
    %2 = arith.truncf %1 : vector<8x8xf32> to vector<8x8xbf16>
    %c0_3 = arith.constant 0 : index
    %c0_4 = arith.constant 0 : index
    %3 = vector.load %arg3[%c0_3, %c0_4] : memref<8x8xf32, #tpu.memory_space<vmem>>, vector<8x8xf32>
    %4 = arith.truncf %3 : vector<8x8xf32> to vector<8x8xbf16>
    %c0_5 = arith.constant 0 : index
    %c0_6 = arith.constant 0 : index
    %5 = vector.load %arg4[%c0_5, %c0_6] : memref<8x128xbf16, #tpu.memory_space<vmem>>, vector<8x128xbf16>
    %cst = arith.constant dense<0.000000e+00> : vector<8x128xf32>
    %6 = tpu.matmul %2, %5, %cst {dimension_numbers = #tpu.dot_dimension_numbers<[1], [0], [0], [1], [0, 0, 1, 1], [], []>} : vector<8x8xbf16>, vector<8x128xbf16>, vector<8x128xf32> -> vector<8x128xf32>
    %c0_7 = arith.constant 0 : index
    %c0_8 = arith.constant 0 : index
    %7 = vector.load %arg5[%c0_7, %c0_8] : memref<8x128xbf16, #tpu.memory_space<vmem>>, vector<8x128xbf16>
    %cst_9 = arith.constant dense<0.000000e+00> : vector<8x128xf32>
    %8 = tpu.matmul %4, %7, %cst_9 {dimension_numbers = #tpu.dot_dimension_numbers<[1], [0], [0], [1], [0, 0, 1, 1], [], []>} : vector<8x8xbf16>, vector<8x128xbf16>, vector<8x128xf32> -> vector<8x128xf32>
    %9 = arith.addf %6, %8 : vector<8x128xf32>
    %c0_10 = arith.constant 0 : index
    %c0_11 = arith.constant 0 : index
    %10 = vector.load %arg6[%c0_10, %c0_11] : memref<1x128xf32, #tpu.memory_space<vmem>>, vector<1x128xf32>
    %11 = vector.broadcast %10 : vector<1x128xf32> to vector<8x128xf32>
    %12 = arith.addf %9, %11 : vector<8x128xf32>
    %cst_12 = arith.constant 0.000000e+00 : f32
    %13 = vector.broadcast %cst_12 : f32 to vector<8x128xf32>
    %14 = arith.maximumf %12, %13 : vector<8x128xf32>
    %15 = arith.truncf %14 : vector<8x128xf32> to vector<8x128xbf16>
    %c0_13 = arith.constant 0 : index
    %c0_14 = arith.constant 0 : index
    %16 = vector.load %arg7[%c0_13, %c0_14] : memref<128x128xbf16, #tpu.memory_space<vmem>>, vector<128x128xbf16>
    %cst_15 = arith.constant dense<0.000000e+00> : vector<8x128xf32>
    %17 = tpu.matmul %15, %16, %cst_15 {dimension_numbers = #tpu.dot_dimension_numbers<[1], [0], [0], [1], [0, 0, 1, 1], [], []>} : vector<8x128xbf16>, vector<128x128xbf16>, vector<8x128xf32> -> vector<8x128xf32>
    %c0_16 = arith.constant 0 : index
    %c0_17 = arith.constant 0 : index
    %18 = vector.load %arg8[%c0_16, %c0_17] : memref<1x128xf32, #tpu.memory_space<vmem>>, vector<1x128xf32>
    %19 = vector.broadcast %18 : vector<1x128xf32> to vector<8x128xf32>
    %20 = arith.addf %17, %19 : vector<8x128xf32>
    %cst_18 = arith.constant 0.000000e+00 : f32
    %21 = vector.broadcast %cst_18 : f32 to vector<8x128xf32>
    %22 = arith.maximumf %20, %21 : vector<8x128xf32>
    %23 = arith.truncf %22 : vector<8x128xf32> to vector<8x128xbf16>
    %c0_19 = arith.constant 0 : index
    %c0_20 = arith.constant 0 : index
    %24 = vector.load %arg9[%c0_19, %c0_20] : memref<128x4xbf16, #tpu.memory_space<vmem>>, vector<128x4xbf16>
    %cst_21 = arith.constant dense<0.000000e+00> : vector<8x4xf32>
    %25 = tpu.matmul %23, %24, %cst_21 {dimension_numbers = #tpu.dot_dimension_numbers<[1], [0], [0], [1], [0, 0, 1, 1], [], []>} : vector<8x128xbf16>, vector<128x4xbf16>, vector<8x4xf32> -> vector<8x4xf32>
    %c0_22 = arith.constant 0 : index
    %c0_23 = arith.constant 0 : index
    %26 = vector.load %arg10[%c0_22, %c0_23] : memref<1x4xf32, #tpu.memory_space<vmem>>, vector<1x4xf32>
    %27 = vector.broadcast %26 : vector<1x4xf32> to vector<8x4xf32>
    %28 = arith.addf %25, %27 : vector<8x4xf32>
    %29 = math.tanh %28 : vector<8x4xf32>
    %30 = vector.broadcast %0 : f32 to vector<8x4xf32>
    %31 = arith.mulf %29, %30 : vector<8x4xf32>
    %c0_24 = arith.constant 0 : index
    %c0_25 = arith.constant 0 : index
    %32 = vector.load %arg11[%c0_24, %c0_25] : memref<8x4xf32, #tpu.memory_space<vmem>>, vector<8x4xf32>
    tpu.vector_store %arg11[%c0_24, %c0_25], %31 {strides = array<i32>} : memref<8x4xf32, #tpu.memory_space<vmem>>, vector<8x4xf32>,
    return
  }
  func.func @transform_0(%arg0: i32) -> (i32, i32) {
    %c0_i32 = arith.constant 0 : i32
    %c0_i32_0 = arith.constant 0 : i32
    %c0_i32_1 = arith.constant 0 : i32
    return %c0_i32, %c0_i32_0 : i32, i32
  }
  func.func @transform_1(%arg0: i32) -> (i32, i32) {
    %c0_i32 = arith.constant 0 : i32
    %c0_i32_0 = arith.constant 0 : i32
    return %arg0, %c0_i32 : i32, i32
  }
  func.func @transform_2(%arg0: i32) -> (i32, i32) {
    %c0_i32 = arith.constant 0 : i32
    %c0_i32_0 = arith.constant 0 : i32
    return %arg0, %c0_i32 : i32, i32
  }
  func.func @transform_3(%arg0: i32) -> (i32, i32) {
    %c0_i32 = arith.constant 0 : i32
    %c0_i32_0 = arith.constant 0 : i32
    %c0_i32_1 = arith.constant 0 : i32
    return %c0_i32, %c0_i32_0 : i32, i32
  }
  func.func @transform_4(%arg0: i32) -> (i32, i32) {
    %c0_i32 = arith.constant 0 : i32
    %c0_i32_0 = arith.constant 0 : i32
    %c0_i32_1 = arith.constant 0 : i32
    return %c0_i32, %c0_i32_0 : i32, i32
  }
  func.func @transform_5(%arg0: i32) -> (i32, i32) {
    %c0_i32 = arith.constant 0 : i32
    %c0_i32_0 = arith.constant 0 : i32
    %c0_i32_1 = arith.constant 0 : i32
    return %c0_i32, %c0_i32_0 : i32, i32
  }
  func.func @transform_6(%arg0: i32) -> (i32, i32) {
    %c0_i32 = arith.constant 0 : i32
    %c0_i32_0 = arith.constant 0 : i32
    %c0_i32_1 = arith.constant 0 : i32
    return %c0_i32, %c0_i32_0 : i32, i32
  }
  func.func @transform_7(%arg0: i32) -> (i32, i32) {
    %c0_i32 = arith.constant 0 : i32
    %c0_i32_0 = arith.constant 0 : i32
    %c0_i32_1 = arith.constant 0 : i32
    return %c0_i32, %c0_i32_0 : i32, i32
  }
  func.func @transform_8(%arg0: i32) -> (i32, i32) {
    %c0_i32 = arith.constant 0 : i32
    %c0_i32_0 = arith.constant 0 : i32
    %c0_i32_1 = arith.constant 0 : i32
    return %c0_i32, %c0_i32_0 : i32, i32
  }
  func.func @transform_9(%arg0: i32) -> (i32, i32) {
    %c0_i32 = arith.constant 0 : i32
    %c0_i32_0 = arith.constant 0 : i32
    %c0_i32_1 = arith.constant 0 : i32
    return %c0_i32, %c0_i32_0 : i32, i32
  }
  func.func @transform_10(%arg0: i32) -> (i32, i32) {
    %c0_i32 = arith.constant 0 : i32
    %c0_i32_0 = arith.constant 0 : i32
    return %arg0, %c0_i32 : i32, i32
  }
}

</mosaic_0001>

<llo_original>
// kernel: actor_forward.1
$region0: #{actor_forward.1}
  #allocation0 [shape = 'u32[]', space=smem, size = 0x4, offset = 0x4, fixed_abs, tag = 'smem constant byte address 0x4 - core index']
  #allocation1 [shape = 'u32[144,128]{1,0:T(1,128)}', space=vmem, size = 0x12000, scoped, tag = 'internal scratch']
  #allocation2 [shape = 'f32[1,1]{1,0:T(1,128)S(6)}', space=smem, size = 0x200, scoped, tag = 'scoped memory for actor_forward.1']
  %s0 = inlined_call_operand.<no memory space> [shape: f32[1,1], index: 0, kind: input, shape index: {}]
  %s1 = inlined_call_operand.vmem [shape: f32[8,8], index: 1, kind: input, shape index: {}]
  %s2 = inlined_call_operand.vmem [shape: f32[8,8], index: 2, kind: input, shape index: {}]
  %s3 = inlined_call_operand.vmem [shape: bf16[8,128], index: 3, kind: input, shape index: {}]
  %s4 = inlined_call_operand.vmem [shape: bf16[8,128], index: 4, kind: input, shape index: {}]
  %s5 = inlined_call_operand.vmem [shape: f32[1,128], index: 5, kind: input, shape index: {}]
  %s6 = inlined_call_operand.vmem [shape: bf16[128,128], index: 6, kind: input, shape index: {}]
  %s7 = inlined_call_operand.vmem [shape: f32[1,128], index: 7, kind: input, shape index: {}]
  %s8 = inlined_call_operand.vmem [shape: bf16[128,4], index: 8, kind: input, shape index: {}]
  %s9 = inlined_call_operand.vmem [shape: f32[1,4], index: 9, kind: input, shape index: {}]
  %s10 = inlined_call_operand.vmem [shape: f32[8,4], index: 10, kind: output, shape index: {}]
  %s11 = sld [smem:[#allocation0]]
  $region50: #{actor_forward.1} parent=0
    _
  %s13 = ssub.s32 1, %s11
  %s14 = scalar_select 0, %s13, %s11
  %15 = sst [smem:[#allocation2]] %s0
  // Predicated region
  $region2: #{actor_forward.1} parent=0 // pred_check
    _
  $region3: #{actor_forward.1} parent=0 // pred_check_branch
    %17 = sbr.rel (0) target = $region5
  $region4: #{actor_forward.1} parent=0 // pred_region
    _
  $region5: #{actor_forward.1} parent=0 // pred_fallthru
    _
  // Predicated region
  $region6: #{actor_forward.1} parent=0 // pred_check
    _
  $region7: #{actor_forward.1} parent=0 // pred_check_branch
    %19 = sbr.rel (0) target = $region9
  $region8: #{actor_forward.1} parent=0 // pred_region
    _
  $region9: #{actor_forward.1} parent=0 // pred_fallthru
    _
  // Predicated region
  $region10: #{actor_forward.1} parent=0 // pred_check
    _
  $region11: #{actor_forward.1} parent=0 // pred_check_branch
    %21 = sbr.rel (0) target = $region13
  $region12: #{actor_forward.1} parent=0 // pred_region
    _
  $region13: #{actor_forward.1} parent=0 // pred_fallthru
    _
  // Predicated region
  $region14: #{actor_forward.1} parent=0 // pred_check
    _
  $region15: #{actor_forward.1} parent=0 // pred_check_branch
    %23 = sbr.rel (0) target = $region17
  $region16: #{actor_forward.1} parent=0 // pred_region
    _
  $region17: #{actor_forward.1} parent=0 // pred_fallthru
    _
  // Predicated region
  $region18: #{actor_forward.1} parent=0 // pred_check
    _
  $region19: #{actor_forward.1} parent=0 // pred_check_branch
    %25 = sbr.rel (0) target = $region21
  $region20: #{actor_forward.1} parent=0 // pred_region
    _
  $region21: #{actor_forward.1} parent=0 // pred_fallthru
    _
  // Predicated region
  $region22: #{actor_forward.1} parent=0 // pred_check
    _
  $region23: #{actor_forward.1} parent=0 // pred_check_branch
    %27 = sbr.rel (0) target = $region25
  $region24: #{actor_forward.1} parent=0 // pred_region
    _
  $region25: #{actor_forward.1} parent=0 // pred_fallthru
    _
  // Predicated region
  $region26: #{actor_forward.1} parent=0 // pred_check
    _
  $region27: #{actor_forward.1} parent=0 // pred_check_branch
    %29 = sbr.rel (0) target = $region29
  $region28: #{actor_forward.1} parent=0 // pred_region
    _
  $region29: #{actor_forward.1} parent=0 // pred_fallthru
    _
  // Predicated region
  $region30: #{actor_forward.1} parent=0 // pred_check
    _
  $region31: #{actor_forward.1} parent=0 // pred_check_branch
    %31 = sbr.rel (0) target = $region33
  $region32: #{actor_forward.1} parent=0 // pred_region
    _
  $region33: #{actor_forward.1} parent=0 // pred_fallthru
    _
  // Predicated region
  $region34: #{actor_forward.1} parent=0 // pred_check
    _
  $region35: #{actor_forward.1} parent=0 // pred_check_branch
    %33 = sbr.rel (0) target = $region37
  $region36: #{actor_forward.1} parent=0 // pred_region
    _
  $region37: #{actor_forward.1} parent=0 // pred_fallthru
    _
  // Predicated region
  $region38: #{actor_forward.1} parent=0 // pred_check
    _
  $region39: #{actor_forward.1} parent=0 // pred_check_branch
    %35 = sbr.rel (0) target = $region41
  $region40: #{actor_forward.1} parent=0 // pred_region
    _
  $region41: #{actor_forward.1} parent=0 // pred_fallthru
    _
  %s37 = sld [smem:[#allocation2]]
  %v38 = vld [vmem:[%s1] sm:$0xff]
  %v39 = vpack.c.bf16 %v38, %v38
  %v40 = vld [vmem:[%s2] sm:$0xff]
  %v41 = vpack.c.bf16 %v40, %v40
  %v42 = vld [vmem:[%s3] sm:$0xf]
  %v43 = vld [vmem:[%s4] sm:$0xf]
  %vm44 = vcmask 64512
  %v46 = vsel %vm44, %v41, 0
  %vm48 = vcmask 1043456
  %v50 = vsel %vm48, %v43, 0
  %52 = vmatprep.subr.bf16.mxu0 0
  %53 = vmatpush1.bf16.msra.mxu0 %v50
  %54 = vmatprep.subr.bf16.mxu0 0
  %55 = vmatpush1.bf16.msra.mxu0 0
  %56 = vmatprep.subr.bf16.mxu0 0
  %57 = vmatpush1.bf16.msra.mxu0 0
  %58 = vmatprep.subr.bf16.mxu0 0
  %59 = vmatpush1.bf16.msra.mxu0 0
  %60 = vmatprep.subr.bf16.mxu0 0
  %61 = vmatpush1.bf16.msra.mxu0 0
  %62 = vmatprep.subr.bf16.mxu0 0
  %63 = vmatpush1.bf16.msra.mxu0 0
  %64 = vmatprep.subr.bf16.mxu0 0
  %65 = vmatpush1.bf16.msra.mxu0 0
  %66 = vmatprep.subr.bf16.mxu0 0
  %67 = vmatpush1.bf16.msra.mxu0 0
  %68 = vmatprep.subr.bf16.mxu0 0
  %69 = vmatpush1.bf16.msra.mxu0 0
  %70 = vmatprep.subr.bf16.mxu0 0
  %71 = vmatpush1.bf16.msra.mxu0 0
  %72 = vmatprep.subr.bf16.mxu0 0
  %73 = vmatpush1.bf16.msra.mxu0 0
  %74 = vmatprep.subr.bf16.mxu0 0
  %75 = vmatpush1.bf16.msra.mxu0 0
  %76 = vmatprep.subr.bf16.mxu0 0
  %77 = vmatpush1.bf16.msra.mxu0 0
  %78 = vmatprep.subr.bf16.mxu0 0
  %79 = vmatpush1.bf16.msra.mxu0 0
  %80 = vmatprep.subr.bf16.mxu0 0
  %81 = vmatpush1.bf16.msra.mxu0 0
  %82 = vmatprep.subr.bf16.mxu0 0
  %83 = vmatpush1.bf16.msra.mxu0 0
  %84 = vmatprep.mubr.bf16.mxu0 0
  %85 = vmatmul.mubr.bf16.gmra.mrb[0].mxu0 %v46
  %v86 = vpop.f32.mrb[0].mxu0
  %v87 = vadd.f32 0.0, %v86
  %v88 = vpop.f32.mrb[0].mxu0
  %v89 = vpop.f32.mrb[0].mxu0
  %v90 = vpop.f32.mrb[0].mxu0
  %91 = vdwg.mxu0
  %v93 = vsel %vm44, %v39, 0
  %v96 = vsel %vm48, %v42, 0
  %98 = vmatprep.subr.bf16.mxu0 0
  %99 = vmatpush1.bf16.msra.mxu0 %v96
  %100 = vmatprep.subr.bf16.mxu0 0
  %101 = vmatpush1.bf16.msra.mxu0 0
  %102 = vmatprep.subr.bf16.mxu0 0
  %103 = vmatpush1.bf16.msra.mxu0 0
  %104 = vmatprep.subr.bf16.mxu0 0
  %105 = vmatpush1.bf16.msra.mxu0 0
  %106 = vmatprep.subr.bf16.mxu0 0
  %107 = vmatpush1.bf16.msra.mxu0 0
  %108 = vmatprep.subr.bf16.mxu0 0
  %109 = vmatpush1.bf16.msra.mxu0 0
  %110 = vmatprep.subr.bf16.mxu0 0
  %111 = vmatpush1.bf16.msra.mxu0 0
  %112 = vmatprep.subr.bf16.mxu0 0
  %113 = vmatpush1.bf16.msra.mxu0 0
  %114 = vmatprep.subr.bf16.mxu0 0
  %115 = vmatpush1.bf16.msra.mxu0 0
  %116 = vmatprep.subr.bf16.mxu0 0
  %117 = vmatpush1.bf16.msra.mxu0 0
  %118 = vmatprep.subr.bf16.mxu0 0
  %119 = vmatpush1.bf16.msra.mxu0 0
  %120 = vmatprep.subr.bf16.mxu0 0
  %121 = vmatpush1.bf16.msra.mxu0 0
  %122 = vmatprep.subr.bf16.mxu0 0
  %123 = vmatpush1.bf16.msra.mxu0 0
  %124 = vmatprep.subr.bf16.mxu0 0
  %125 = vmatpush1.bf16.msra.mxu0 0
  %126 = vmatprep.subr.bf16.mxu0 0
  %127 = vmatpush1.bf16.msra.mxu0 0
  %128 = vmatprep.subr.bf16.mxu0 0
  %129 = vmatpush1.bf16.msra.mxu0 0
  %130 = vmatprep.mubr.bf16.mxu0 0
  %131 = vmatmul.mubr.bf16.gmra.mrb[0].mxu0 %v93
  %v132 = vpop.f32.mrb[0].mxu0
  %v133 = vadd.f32 %v87, %v132
  %v134 = vpop.f32.mrb[0].mxu0
  %v135 = vpop.f32.mrb[0].mxu0
  %v136 = vpop.f32.mrb[0].mxu0
  %137 = vdwg.mxu0
  %v138 = vld [vmem:[%s5] sm:$0x1]
  %v140 = vlaneseq
  %v141 = vshrl.u32 %v140, 7
  %v142 = vsub.s32 0, %v141
  %v143 = vrot.slane %v138, %v142
  %v145 = vadd.f32 %v133, %v143
  %v146 = vmax.f32 %v145, 0.0
  %v147 = vpack.c.bf16 %v146, %v146
  %v148 = vld [vmem:[%s6] sm:$0xf]
  %v149 = vld [vmem:[%s6 + $0x4] sm:$0xf]
  %v150 = vld [vmem:[%s6 + $0x8] sm:$0xf]
  %v151 = vld [vmem:[%s6 + $0xc] sm:$0xf]
  %v152 = vld [vmem:[%s6 + $0x10] sm:$0xf]
  %v153 = vld [vmem:[%s6 + $0x14] sm:$0xf]
  %v154 = vld [vmem:[%s6 + $0x18] sm:$0xf]
  %v155 = vld [vmem:[%s6 + $0x1c] sm:$0xf]
  %v156 = vld [vmem:[%s6 + $0x20] sm:$0xf]
  %v157 = vld [vmem:[%s6 + $0x24] sm:$0xf]
  %v158 = vld [vmem:[%s6 + $0x28] sm:$0xf]
  %v159 = vld [vmem:[%s6 + $0x2c] sm:$0xf]
  %v160 = vld [vmem:[%s6 + $0x30] sm:$0xf]
  %v161 = vld [vmem:[%s6 + $0x34] sm:$0xf]
  %v162 = vld [vmem:[%s6 + $0x38] sm:$0xf]
  %v163 = vld [vmem:[%s6 + $0x3c] sm:$0xf]
  %v164 = vld [vmem:[%s7] sm:$0x1]
  %v166 = vlaneseq
  %v167 = vshrl.u32 %v166, 7
  %v168 = vsub.s32 0, %v167
  %v169 = vrot.slane %v164, %v168
  %v187 = vunpack.c.l.b16 %v148
  %v188 = vunpack.c.l.b16 %v149
  %v189 = vunpack.c.l.b16 %v150
  %v190 = vunpack.c.l.b16 %v151
  %v191 = vunpack.c.l.b16 %v152
  %v192 = vunpack.c.l.b16 %v153
  %v193 = vunpack.c.l.b16 %v154
  %v194 = vunpack.c.l.b16 %v155
  %v195 = vunpack.c.l.b16 %v156
  %v196 = vunpack.c.l.b16 %v157
  %v197 = vunpack.c.l.b16 %v158
  %v198 = vunpack.c.l.b16 %v159
  %v199 = vunpack.c.l.b16 %v160
  %v200 = vunpack.c.l.b16 %v161
  %v201 = vunpack.c.l.b16 %v162
  %v202 = vunpack.c.l.b16 %v163
  %v203 = vpack.c.b16 %v188, %v187
  %v204 = vpack.c.b16 %v190, %v189
  %v205 = vpack.c.b16 %v192, %v191
  %v206 = vpack.c.b16 %v194, %v193
  %v207 = vpack.c.b16 %v196, %v195
  %v208 = vpack.c.b16 %v198, %v197
  %v209 = vpack.c.b16 %v200, %v199
  %v210 = vpack.c.b16 %v202, %v201
  %219 = vmatprep.subr.bf16.mxu0 0
  %220 = vmatpush1.bf16.msra.mxu0 %v203
  %221 = vmatprep.subr.bf16.mxu0 0
  %222 = vmatpush1.bf16.msra.mxu0 %v204
  %223 = vmatprep.subr.bf16.mxu0 0
  %224 = vmatpush1.bf16.msra.mxu0 %v205
  %225 = vmatprep.subr.bf16.mxu0 0
  %226 = vmatpush1.bf16.msra.mxu0 %v206
  %227 = vmatprep.subr.bf16.mxu0 0
  %228 = vmatpush1.bf16.msra.mxu0 %v207
  %229 = vmatprep.subr.bf16.mxu0 0
  %230 = vmatpush1.bf16.msra.mxu0 %v208
  %231 = vmatprep.subr.bf16.mxu0 0
  %232 = vmatpush1.bf16.msra.mxu0 %v209
  %233 = vmatprep.subr.bf16.mxu0 0
  %234 = vmatpush1.bf16.msra.mxu0 %v210
  %235 = vmatprep.subr.bf16.mxu0 0
  %236 = vmatpush1.bf16.msra.mxu0 0
  %237 = vmatprep.subr.bf16.mxu0 0
  %238 = vmatpush1.bf16.msra.mxu0 0
  %239 = vmatprep.subr.bf16.mxu0 0
  %240 = vmatpush1.bf16.msra.mxu0 0
  %241 = vmatprep.subr.bf16.mxu0 0
  %242 = vmatpush1.bf16.msra.mxu0 0
  %243 = vmatprep.subr.bf16.mxu0 0
  %244 = vmatpush1.bf16.msra.mxu0 0
  %245 = vmatprep.subr.bf16.mxu0 0
  %246 = vmatpush1.bf16.msra.mxu0 0
  %247 = vmatprep.subr.bf16.mxu0 0
  %248 = vmatpush1.bf16.msra.mxu0 0
  %249 = vmatprep.subr.bf16.mxu0 0
  %250 = vmatpush1.bf16.msra.mxu0 0
  %251 = vmatprep.mubr.bf16.mxu0 0
  %252 = vmatmul.mubr.bf16.gmra.mrb[0].mxu0 %v147
  %v253 = vpop.f32.mrb[0].mxu0
  %v254 = vadd.f32 %v169, %v253
  %v255 = vpop.f32.mrb[0].mxu0
  %v256 = vpop.f32.mrb[0].mxu0
  %v257 = vpop.f32.mrb[0].mxu0
  %258 = vdwg.mxu0
  %v259 = vmax.f32 %v254, 0.0
  %v260 = vpack.c.bf16 %v259, %v259
  %v261 = vld [vmem:[%s8] sm:$0xf]
  %v262 = vld [vmem:[%s8 + $0x4] sm:$0xf]
  %v263 = vld [vmem:[%s8 + $0x8] sm:$0xf]
  %v264 = vld [vmem:[%s8 + $0xc] sm:$0xf]
  %v265 = vld [vmem:[%s8 + $0x10] sm:$0xf]
  %v266 = vld [vmem:[%s8 + $0x14] sm:$0xf]
  %v267 = vld [vmem:[%s8 + $0x18] sm:$0xf]
  %v268 = vld [vmem:[%s8 + $0x1c] sm:$0xf]
  %v269 = vld [vmem:[%s8 + $0x20] sm:$0xf]
  %v270 = vld [vmem:[%s8 + $0x24] sm:$0xf]
  %v271 = vld [vmem:[%s8 + $0x28] sm:$0xf]
  %v272 = vld [vmem:[%s8 + $0x2c] sm:$0xf]
  %v273 = vld [vmem:[%s8 + $0x30] sm:$0xf]
  %v274 = vld [vmem:[%s8 + $0x34] sm:$0xf]
  %v275 = vld [vmem:[%s8 + $0x38] sm:$0xf]
  %v276 = vld [vmem:[%s8 + $0x3c] sm:$0xf]
  %v277 = vld [vmem:[%s9] sm:$0x1]
  %v279 = vlaneseq
  %v280 = vshrl.u32 %v279, 7
  %v281 = vsub.s32 0, %v280
  %v282 = vrot.slane %v277, %v281
  %v300 = vunpack.c.l.b16 %v261
  %v301 = vunpack.c.l.b16 %v262
  %v302 = vunpack.c.l.b16 %v263
  %v303 = vunpack.c.l.b16 %v264
  %v304 = vunpack.c.l.b16 %v265
  %v305 = vunpack.c.l.b16 %v266
  %v306 = vunpack.c.l.b16 %v267
  %v307 = vunpack.c.l.b16 %v268
  %v308 = vunpack.c.l.b16 %v269
  %v309 = vunpack.c.l.b16 %v270
  %v310 = vunpack.c.l.b16 %v271
  %v311 = vunpack.c.l.b16 %v272
  %v312 = vunpack.c.l.b16 %v273
  %v313 = vunpack.c.l.b16 %v274
  %v314 = vunpack.c.l.b16 %v275
  %v315 = vunpack.c.l.b16 %v276
  %v316 = vpack.c.b16 %v301, %v300
  %v317 = vpack.c.b16 %v303, %v302
  %v318 = vpack.c.b16 %v305, %v304
  %v319 = vpack.c.b16 %v307, %v306
  %v320 = vpack.c.b16 %v309, %v308
  %v321 = vpack.c.b16 %v311, %v310
  %v322 = vpack.c.b16 %v313, %v312
  %v323 = vpack.c.b16 %v315, %v314
  %332 = vmatprep.subr.bf16.mxu0 0
  %333 = vmatpush1.bf16.msra.mxu0 %v316
  %334 = vmatprep.subr.bf16.mxu0 0
  %335 = vmatpush1.bf16.msra.mxu0 %v317
  %336 = vmatprep.subr.bf16.mxu0 0
  %337 = vmatpush1.bf16.msra.mxu0 %v318
  %338 = vmatprep.subr.bf16.mxu0 0
  %339 = vmatpush1.bf16.msra.mxu0 %v319
  %340 = vmatprep.subr.bf16.mxu0 0
  %341 = vmatpush1.bf16.msra.mxu0 %v320
  %342 = vmatprep.subr.bf16.mxu0 0
  %343 = vmatpush1.bf16.msra.mxu0 %v321
  %344 = vmatprep.subr.bf16.mxu0 0
  %345 = vmatpush1.bf16.msra.mxu0 %v322
  %346 = vmatprep.subr.bf16.mxu0 0
  %347 = vmatpush1.bf16.msra.mxu0 %v323
  %348 = vmatprep.subr.bf16.mxu0 0
  %349 = vmatpush1.bf16.msra.mxu0 0
  %350 = vmatprep.subr.bf16.mxu0 0
  %351 = vmatpush1.bf16.msra.mxu0 0
  %352 = vmatprep.subr.bf16.mxu0 0
  %353 = vmatpush1.bf16.msra.mxu0 0
  %354 = vmatprep.subr.bf16.mxu0 0
  %355 = vmatpush1.bf16.msra.mxu0 0
  %356 = vmatprep.subr.bf16.mxu0 0
  %357 = vmatpush1.bf16.msra.mxu0 0
  %358 = vmatprep.subr.bf16.mxu0 0
  %359 = vmatpush1.bf16.msra.mxu0 0
  %360 = vmatprep.subr.bf16.mxu0 0
  %361 = vmatpush1.bf16.msra.mxu0 0
  %362 = vmatprep.subr.bf16.mxu0 0
  %363 = vmatpush1.bf16.msra.mxu0 0
  %364 = vmatprep.mubr.bf16.mxu0 0
  %365 = vmatmul.mubr.bf16.gmra.mrb[0].mxu0 %v260
  %v366 = vpop.f32.mrb[0].mxu0
  %v367 = vadd.f32 %v282, %v366
  %v368 = vpop.f32.mrb[0].mxu0
  %v369 = vpop.f32.mrb[0].mxu0
  %v370 = vpop.f32.mrb[0].mxu0
  %371 = vdwg.mxu0
  %v372 = vtanh.pop %v367
  %v373 = vstv %s37
  %v374 = vmul.f32 %v372, %v373
  %vm375 = vcmask 31744
  %376 = vst.msk [vmem:[%s10] sm:$0xff] %vm375, %v374
  // Predicated region
  $region42: #{actor_forward.1} parent=0 // pred_check
    _
  $region43: #{actor_forward.1} parent=0 // pred_check_branch
    %378 = sbr.rel (0) target = $region45
  $region44: #{actor_forward.1} parent=0 // pred_region
    _
  $region45: #{actor_forward.1} parent=0 // pred_fallthru
    _
  // Predicated region
  $region46: #{actor_forward.1} parent=0 // pred_check
    _
  $region47: #{actor_forward.1} parent=0 // pred_check_branch
    %380 = sbr.rel (0) target = $region49
  $region48: #{actor_forward.1} parent=0 // pred_region
    _
  $region49: #{actor_forward.1} parent=0 // pred_fallthru
    _

</llo_original>
